<compile_context>
chip_gen: v5e
topology: v5e:2x2
jax: 0.10.0
libtpu: 0.0.40
codegen_flags: <defaults>
</compile_context>

<pallas_src>
import functools

import jax
import jax.numpy as jnp
from jax.experimental import pallas as pl
from jax.experimental.pallas import tpu as pltpu


def _round_up(n, m):
    return ((n + m - 1) // m) * m


def _running_on_v5():
    try:
        kind = jax.devices()[0].device_kind.lower()
    except Exception:
        return False
    return "v5" in kind


# --------------------------------------------------------------------------- #
# Kernel
# --------------------------------------------------------------------------- #
def mddnet_kernel(pooled_ref, w_stem_ref, w_bot_ref, w_head1_ref, w2_ref,
                  bias_ref, feat_ref, packed_ref,
                  *, chans, feat_dim, bot_dim, width, pad_class,
                  fuse_heads, b_off):
    o_stem, o_bot, o_head1, o_heads2 = b_off
    b_stem = bias_ref[:, o_stem:o_stem + feat_dim]
    b_bot = bias_ref[:, o_bot:o_bot + bot_dim]
    b_head1 = bias_ref[:, o_head1:o_head1 + 2 * width]
    b_heads2 = bias_ref[:, o_heads2:o_heads2 + 2 * pad_class]

    pooled = pooled_ref[...]                                      # [TB, C] f32

    # ---- base network stand-in: linear stem + ReLU on GAP'd input ----
    # TODO(synk): the real ResNet50 backbone ("backbone.network_dict") is an
    # external dependency; replaced by GAP (in the wrapper) + linear stem with
    # the same downstream semantics.
    if chans <= 8:
        # tiny K: a few VPU FMAs are cheaper than a K=4 pass through the MXU
        w_stem = w_stem_ref[...].astype(jnp.float32)              # [C, F]
        base = pooled[:, 0:1] * w_stem[0:1, :]
        for k in range(1, chans):
            base = base + pooled[:, k:k + 1] * w_stem[k:k + 1, :]
        base = base + b_stem
    else:
        base = jnp.dot(pooled.astype(jnp.bfloat16), w_stem_ref[...],
                       preferred_element_type=jnp.float32) + b_stem
    base = jnp.maximum(base, 0.0)                                 # [TB, F]

    # ---- bottleneck: Linear (eval BN folded in) -> ReLU -> Dropout(identity) ----
    h = jnp.dot(base.astype(jnp.bfloat16), w_bot_ref[...],
                preferred_element_type=jnp.float32) + b_bot
    feats = jnp.maximum(h, 0.0)                                   # [TB, D]
    feat_ref[...] = feats

    # ---- GRL forward = identity; both heads' first layers fused in one matmul ----
    z = jnp.dot(feats.astype(jnp.bfloat16), w_head1_ref[...],
                preferred_element_type=jnp.float32) + b_head1
    z = jnp.maximum(z, 0.0)                                       # [TB, 2W]

    # ---- second layers; softmax pad-mask already baked into b_heads2 ----
    if fuse_heads:
        # one 256-wide block-diagonal pass (v6e/v7x MXU-native shape)
        logits_all = jnp.dot(z.astype(jnp.bfloat16), w2_ref[...],
                             preferred_element_type=jnp.float32) + b_heads2
        logits = logits_all[:, :pad_class]
        logits_adv = logits_all[:, pad_class:]
    else:
        # v5e: two native 128x128 passes
        z1 = z[:, :width]
        z2 = z[:, width:]
        logits = jnp.dot(z1.astype(jnp.bfloat16), w2_ref[0],
                         preferred_element_type=jnp.float32) + b_heads2[:, :pad_class]
        logits_adv = jnp.dot(z2.astype(jnp.bfloat16), w2_ref[1],
                             preferred_element_type=jnp.float32) + b_heads2[:, pad_class:]

    # ---- softmax over dim=1 (padded columns carry -1e30 bias -> exp == 0) ----
    m = jnp.max(logits, axis=1, keepdims=True)
    e = jnp.exp(logits - m)
    s = jnp.sum(e, axis=1, keepdims=True)
    sm = e * pl.reciprocal(s, approx=True)

    # single lane-dense store: [logits | softmax | logits_adv]
    packed_ref[...] = jnp.concatenate([logits, sm, logits_adv], axis=1)


# --------------------------------------------------------------------------- #
# Wrapper
# --------------------------------------------------------------------------- #
def mddnet_forward(x, folded, *, num_class):
    """x: [B, C, H, W] (NCHW). Returns (features, outputs, softmax, outputs_adv)."""
    B = x.shape[0]
    # GAP in the wrapper: shrinks the kernel's largest DMA from B*C*H*W to B*C.
    pooled = jnp.mean(x, axis=(2, 3)).astype(jnp.float32)         # [B, C]

    p = folded
    chans, feat_dim = p["chans"], p["feat_dim"]
    bot_dim, width, pad_class = p["bot_dim"], p["width"], p["pad_class"]
    n_bias = p["bias_packed"].shape[1]
    w2 = p["w_heads2"]

    TB = min(B, p["tile_b_cap"])
    grid = (pl.cdiv(B, TB),)

    kernel = functools.partial(
        mddnet_kernel,
        chans=chans, feat_dim=feat_dim, bot_dim=bot_dim, width=width,
        pad_class=pad_class, fuse_heads=p["fuse_heads"],
        b_off=p["bias_offsets"])

    grid_spec = pltpu.PrefetchScalarGridSpec(
        num_scalar_prefetch=0,
        grid=grid,
        in_specs=[
            pl.BlockSpec((TB, chans), lambda i: (i, 0)),           # pooled (streams)
            # weights / packed bias: constant index_map -> VMEM-resident across steps
            pl.BlockSpec((chans, feat_dim), lambda i: (0, 0)),
            pl.BlockSpec((feat_dim, bot_dim), lambda i: (0, 0)),
            pl.BlockSpec((bot_dim, 2 * width), lambda i: (0, 0)),
            pl.BlockSpec(w2.shape, lambda i: (0,) * w2.ndim),
            pl.BlockSpec((1, n_bias), lambda i: (0, 0)),
        ],
        out_specs=[
            pl.BlockSpec((TB, bot_dim), lambda i: (i, 0)),
            pl.BlockSpec((TB, 3 * pad_class), lambda i: (i, 0)),
        ],
    )

    out_shape = (
        jax.ShapeDtypeStruct((B, bot_dim), jnp.float32),           # features
        jax.ShapeDtypeStruct((B, 3 * pad_class), jnp.float32),     # [out|softmax|adv]
    )

    feats, packed = pl.pallas_call(
        kernel,
        out_shape=out_shape,
        grid_spec=grid_spec,
        compiler_params=pltpu.CompilerParams(
            dimension_semantics=("parallel",)),                    # v7x: 2 TCs share batch
    )(pooled, p["w_stem"], p["w_bot"], p["w_head1"], w2, p["bias_packed"])

    pc = pad_class
    outputs = packed[:, :num_class]
    softmax_out = packed[:, pc:pc + num_class]
    outputs_adv = packed[:, 2 * pc:2 * pc + num_class]
    return feats, outputs, softmax_out, outputs_adv


# --------------------------------------------------------------------------- #
# Parameters
# --------------------------------------------------------------------------- #
def init_params(key, in_channels, feat_dim, bottleneck_dim, width, class_num):
    """Raw f32 params mirroring MDDNet.__init__ custom initializers."""
    ks = jax.random.split(key, 8)
    f32 = jnp.float32

    # backbone substitute stem
    w_stem = jax.random.normal(ks[0], (in_channels, feat_dim), f32) * 0.05
    b_stem = jnp.zeros((1, feat_dim), f32)

    # bottleneck: weight ~ N(0, 0.005), bias = 0.1
    w_bot = jax.random.normal(ks[1], (feat_dim, bottleneck_dim), f32) * 0.005
    b_bot = jnp.full((1, bottleneck_dim), 0.1, f32)

    # BatchNorm1d defaults (eval): gamma=1, beta=0, running_mean=0, running_var=1
    bn_g = jnp.ones((1, bottleneck_dim), f32)
    bn_b = jnp.zeros((1, bottleneck_dim), f32)
    bn_m = jnp.zeros((1, bottleneck_dim), f32)
    bn_v = jnp.ones((1, bottleneck_dim), f32)

    # classifier_layer: weights ~ N(0, 0.01), bias = 0
    w_c1a = jax.random.normal(ks[2], (bottleneck_dim, width), f32) * 0.01
    b_c1a = jnp.zeros((1, width), f32)
    w_c1b = jax.random.normal(ks[3], (width, class_num), f32) * 0.01
    b_c1b = jnp.zeros((1, class_num), f32)

    # classifier_layer_2: weights ~ N(0, 0.01), bias = 0
    w_c2a = jax.random.normal(ks[4], (bottleneck_dim, width), f32) * 0.01
    b_c2a = jnp.zeros((1, width), f32)
    w_c2b = jax.random.normal(ks[5], (width, class_num), f32) * 0.01
    b_c2b = jnp.zeros((1, class_num), f32)

    return (w_stem, b_stem, w_bot, b_bot, bn_g, bn_b, bn_m, bn_v,
            w_c1a, b_c1a, w_c1b, b_c1b, w_c2a, b_c2a, w_c2b, b_c2b)


def fold_params(raw, class_num, *, fuse_heads, tile_b_cap):
    """Fold eval BN into the bottleneck Linear, fuse head layers, pad the class
    dim to a lane-dense 128 multiple, bake the softmax pad-mask into the bias,
    pack all biases into one row, and cast weight matrices to bf16."""
    (w_stem, b_stem, w_bot, b_bot, bn_g, bn_b, bn_m, bn_v,
     w_c1a, b_c1a, w_c1b, b_c1b, w_c2a, b_c2a, w_c2b, b_c2b) = raw
    f32, bf16 = jnp.float32, jnp.bfloat16

    # eval-mode BatchNorm1d folded into the bottleneck Linear
    eps = jnp.float32(1e-5)
    scale = bn_g / jnp.sqrt(bn_v + eps)                 # [1, D]
    w_bot_f = w_bot * scale
    b_bot_f = (b_bot - bn_m) * scale + bn_b

    # both heads' first Linear fused into one [D, 2W] matmul
    w_head1 = jnp.concatenate([w_c1a, w_c2a], axis=1)
    b_head1 = jnp.concatenate([b_c1a, b_c2a], axis=1)

    width = w_c1a.shape[1]
    pad_class = _round_up(max(class_num, 128), 128)
    pad = pad_class - class_num

    # pad class dim; bake the softmax pad-mask into the main head's bias
    w_c1b_p = jnp.pad(w_c1b, ((0, 0), (0, pad)))
    w_c2b_p = jnp.pad(w_c2b, ((0, 0), (0, pad)))
    b_c1b_p = jnp.pad(b_c1b, ((0, 0), (0, pad)), constant_values=-1e30)
    b_c2b_p = jnp.pad(b_c2b, ((0, 0), (0, pad)))

    if fuse_heads:
        # block-diagonal [2W, 2*pad_class]: one 256-wide MXU pass on v6e/v7x
        top = jnp.concatenate([w_c1b_p, jnp.zeros_like(w_c2b_p)], axis=1)
        bot = jnp.concatenate([jnp.zeros_like(w_c1b_p), w_c2b_p], axis=1)
        w_heads2 = jnp.concatenate([top, bot], axis=0)
    else:
        # v5e: keep two native 128x128 matmuls
        w_heads2 = jnp.stack([w_c1b_p, w_c2b_p], axis=0)
    b_heads2 = jnp.concatenate([b_c1b_p, b_c2b_p], axis=1)

    # pack all bias rows into a single DMA (segments padded to lane multiples)
    parts, offsets, off = [], [], 0
    for seg in (b_stem, b_bot_f, b_head1, b_heads2):
        wseg = seg.shape[1]
        wpad = _round_up(wseg, 128)
        parts.append(jnp.pad(seg.astype(f32), ((0, 0), (0, wpad - wseg))))
        offsets.append(off)
        off += wpad
    bias_packed = jnp.concatenate(parts, axis=1)

    return dict(
        w_stem=w_stem.astype(bf16),
        w_bot=w_bot_f.astype(bf16),
        w_head1=w_head1.astype(bf16),
        w_heads2=w_heads2.astype(bf16),
        bias_packed=bias_packed,
        bias_offsets=tuple(offsets),
        chans=w_stem.shape[0],
        feat_dim=w_stem.shape[1],
        bot_dim=w_bot.shape[1],
        width=width,
        pad_class=pad_class,
        fuse_heads=fuse_heads,
        tile_b_cap=tile_b_cap,
    )


# --------------------------------------------------------------------------- #
# Pure-JAX reference (true f32 semantics, raw params)
# --------------------------------------------------------------------------- #
def reference_forward(x, raw, *, class_num):
    (w_stem, b_stem, w_bot, b_bot, bn_g, bn_b, bn_m, bn_v,
     w_c1a, b_c1a, w_c1b, b_c1b, w_c2a, b_c2a, w_c2b, b_c2b) = raw
    pooled = jnp.mean(x, axis=(2, 3))
    base = jnp.maximum(pooled @ w_stem + b_stem, 0.0)
    h = base @ w_bot + b_bot
    h = (h - bn_m) / jnp.sqrt(bn_v + 1e-5) * bn_g + bn_b
    feats = jnp.maximum(h, 0.0)

    def head(wa, ba, wb, bb):
        z = jnp.maximum(feats @ wa + ba, 0.0)
        return z @ wb + bb

    outputs = head(w_c1a, b_c1a, w_c1b, b_c1b)
    outputs_adv = head(w_c2a, b_c2a, w_c2b, b_c2b)
    softmax_out = jax.nn.softmax(outputs, axis=1)
    return feats, outputs, softmax_out, outputs_adv


if __name__ == "__main__":
    key = jax.random.PRNGKey(0)
    k_x, k_p = jax.random.split(key)

    # small shapes consistent with the module's forward (128-multiples keep
    # every in-kernel slice on a lane-tile boundary)
    B, C, H, W = 8, 4, 16, 16
    feat_dim = 128          # stand-in for base_network.output_num()
    bottleneck_dim = 128
    width = 128
    class_num = 31

    x = jax.random.normal(k_x, (B, C, H, W), jnp.float32)
    raw = init_params(k_p, C, feat_dim, bottleneck_dim, width, class_num)

    on_v5 = _running_on_v5()
    folded = fold_params(raw, class_num,
                         fuse_heads=not on_v5,          # v6e/v7x: 256-wide fused pass
                         tile_b_cap=128 if on_v5 else 256)

    features, outputs, softmax_outputs, outputs_adv = jax.block_until_ready(
        mddnet_forward(x, folded, num_class=class_num))

    assert features.shape == (B, bottleneck_dim)
    assert outputs.shape == (B, class_num)
    assert softmax_outputs.shape == (B, class_num)
    assert outputs_adv.shape == (B, class_num)

    # softmax rows must sum to 1 over the real class columns
    # (approx reciprocal -> slightly looser tolerance)
    assert jnp.allclose(jnp.sum(softmax_outputs, axis=1), 1.0, atol=2e-3)

    # compare against the pure-JAX f32 reference (bf16 weights in the kernel)
    r_feat, r_out, r_sm, r_adv = reference_forward(x, raw, class_num=class_num)
    assert jnp.allclose(features, r_feat, atol=2e-3)
    assert jnp.allclose(outputs, r_out, atol=2e-3)
    assert jnp.allclose(softmax_outputs, r_sm, atol=2e-3)
    assert jnp.allclose(outputs_adv, r_adv, atol=2e-3)

    print("KERNEL_OK")
</pallas_src>

<mosaic_0001>
module attributes {stable_mosaic.version = 11 : i64} {
  func.func @mddnet_kernel(%arg0: i32, %arg1: memref<8x4xf32, #tpu.memory_space<vmem>>, %arg2: memref<4x128xbf16, #tpu.memory_space<vmem>>, %arg3: memref<128x128xbf16, #tpu.memory_space<vmem>>, %arg4: memref<128x256xbf16, #tpu.memory_space<vmem>>, %arg5: memref<256x256xbf16, #tpu.memory_space<vmem>>, %arg6: memref<1x768xf32, #tpu.memory_space<vmem>>, %arg7: memref<8x128xf32, #tpu.memory_space<vmem>>, %arg8: memref<8x384xf32, #tpu.memory_space<vmem>>) attributes {dimension_semantics = [#tpu.dimension_semantics<parallel>], iteration_bounds = array<i64: 1>, scalar_prefetch = 0 : i64, scratch_operands = 0 : i64, tpu.core_type = #tpu.core_type<tc>, window_params = [{transform_indices = @transform_0, window_bounds = array<i64: 8, 4>}, {pipeline_mode = #tpu.pipeline_mode<synchronous>, transform_indices = @transform_1, window_bounds = array<i64: 4, 128>}, {pipeline_mode = #tpu.pipeline_mode<synchronous>, transform_indices = @transform_2, window_bounds = array<i64: 128, 128>}, {pipeline_mode = #tpu.pipeline_mode<synchronous>, transform_indices = @transform_3, window_bounds = array<i64: 128, 256>}, {pipeline_mode = #tpu.pipeline_mode<synchronous>, transform_indices = @transform_4, window_bounds = array<i64: 256, 256>}, {pipeline_mode = #tpu.pipeline_mode<synchronous>, transform_indices = @transform_5, window_bounds = array<i64: 1, 768>}, {transform_indices = @transform_6, window_bounds = array<i64: 8, 128>}, {transform_indices = @transform_7, window_bounds = array<i64: 8, 384>}]} {
    %c0 = arith.constant 0 : index
    %c0_0 = arith.constant 0 : index
    %0 = vector.load %arg6[%c0, %c0_0] : memref<1x768xf32, #tpu.memory_space<vmem>>, vector<1x128xf32>
    %c0_1 = arith.constant 0 : index
    %c128 = arith.constant 128 : index
    %1 = vector.load %arg6[%c0_1, %c128] : memref<1x768xf32, #tpu.memory_space<vmem>>, vector<1x128xf32>
    %c0_2 = arith.constant 0 : index
    %c256 = arith.constant 256 : index
    %2 = vector.load %arg6[%c0_2, %c256] : memref<1x768xf32, #tpu.memory_space<vmem>>, vector<1x256xf32>
    %c0_3 = arith.constant 0 : index
    %c512 = arith.constant 512 : index
    %3 = vector.load %arg6[%c0_3, %c512] : memref<1x768xf32, #tpu.memory_space<vmem>>, vector<1x256xf32>
    %c0_4 = arith.constant 0 : index
    %c0_5 = arith.constant 0 : index
    %4 = vector.load %arg1[%c0_4, %c0_5] : memref<8x4xf32, #tpu.memory_space<vmem>>, vector<8x4xf32>
    %c0_6 = arith.constant 0 : index
    %c0_7 = arith.constant 0 : index
    %5 = vector.load %arg2[%c0_6, %c0_7] : memref<4x128xbf16, #tpu.memory_space<vmem>>, vector<4x128xbf16>
    %6 = arith.extf %5 : vector<4x128xbf16> to vector<4x128xf32>
    %7 = vector.extract_strided_slice %4 {offsets = [0, 0], sizes = [8, 1], strides = [1, 1]} : vector<8x4xf32> to vector<8x1xf32>
    %8 = vector.extract_strided_slice %6 {offsets = [0, 0], sizes = [1, 128], strides = [1, 1]} : vector<4x128xf32> to vector<1x128xf32>
    %9 = vector.broadcast %7 : vector<8x1xf32> to vector<8x128xf32>
    %10 = vector.broadcast %8 : vector<1x128xf32> to vector<8x128xf32>
    %11 = arith.mulf %9, %10 : vector<8x128xf32>
    %12 = vector.extract_strided_slice %4 {offsets = [0, 1], sizes = [8, 1], strides = [1, 1]} : vector<8x4xf32> to vector<8x1xf32>
    %13 = vector.extract_strided_slice %6 {offsets = [1, 0], sizes = [1, 128], strides = [1, 1]} : vector<4x128xf32> to vector<1x128xf32>
    %14 = vector.broadcast %12 : vector<8x1xf32> to vector<8x128xf32>
    %15 = vector.broadcast %13 : vector<1x128xf32> to vector<8x128xf32>
    %16 = arith.mulf %14, %15 : vector<8x128xf32>
    %17 = arith.addf %11, %16 : vector<8x128xf32>
    %18 = vector.extract_strided_slice %4 {offsets = [0, 2], sizes = [8, 1], strides = [1, 1]} : vector<8x4xf32> to vector<8x1xf32>
    %19 = vector.extract_strided_slice %6 {offsets = [2, 0], sizes = [1, 128], strides = [1, 1]} : vector<4x128xf32> to vector<1x128xf32>
    %20 = vector.broadcast %18 : vector<8x1xf32> to vector<8x128xf32>
    %21 = vector.broadcast %19 : vector<1x128xf32> to vector<8x128xf32>
    %22 = arith.mulf %20, %21 : vector<8x128xf32>
    %23 = arith.addf %17, %22 : vector<8x128xf32>
    %24 = vector.extract_strided_slice %4 {offsets = [0, 3], sizes = [8, 1], strides = [1, 1]} : vector<8x4xf32> to vector<8x1xf32>
    %25 = vector.extract_strided_slice %6 {offsets = [3, 0], sizes = [1, 128], strides = [1, 1]} : vector<4x128xf32> to vector<1x128xf32>
    %26 = vector.broadcast %24 : vector<8x1xf32> to vector<8x128xf32>
    %27 = vector.broadcast %25 : vector<1x128xf32> to vector<8x128xf32>
    %28 = arith.mulf %26, %27 : vector<8x128xf32>
    %29 = arith.addf %23, %28 : vector<8x128xf32>
    %30 = vector.broadcast %0 : vector<1x128xf32> to vector<8x128xf32>
    %31 = arith.addf %29, %30 : vector<8x128xf32>
    %cst = arith.constant 0.000000e+00 : f32
    %32 = vector.broadcast %cst : f32 to vector<8x128xf32>
    %33 = arith.maximumf %31, %32 : vector<8x128xf32>
    %34 = arith.truncf %33 : vector<8x128xf32> to vector<8x128xbf16>
    %c0_8 = arith.constant 0 : index
    %c0_9 = arith.constant 0 : index
    %35 = vector.load %arg3[%c0_8, %c0_9] : memref<128x128xbf16, #tpu.memory_space<vmem>>, vector<128x128xbf16>
    %cst_10 = arith.constant dense<0.000000e+00> : vector<8x128xf32>
    %36 = tpu.matmul %34, %35, %cst_10 {dimension_numbers = #tpu.dot_dimension_numbers<[1], [0], [0], [1], [0, 0, 1, 1], [], []>} : vector<8x128xbf16>, vector<128x128xbf16>, vector<8x128xf32> -> vector<8x128xf32>
    %37 = vector.broadcast %1 : vector<1x128xf32> to vector<8x128xf32>
    %38 = arith.addf %36, %37 : vector<8x128xf32>
    %cst_11 = arith.constant 0.000000e+00 : f32
    %39 = vector.broadcast %cst_11 : f32 to vector<8x128xf32>
    %40 = arith.maximumf %38, %39 : vector<8x128xf32>
    %c0_12 = arith.constant 0 : index
    %c0_13 = arith.constant 0 : index
    %41 = vector.load %arg7[%c0_12, %c0_13] : memref<8x128xf32, #tpu.memory_space<vmem>>, vector<8x128xf32>
    tpu.vector_store %arg7[%c0_12, %c0_13], %40 {strides = array<i32>} : memref<8x128xf32, #tpu.memory_space<vmem>>, vector<8x128xf32>,
    %42 = arith.truncf %40 : vector<8x128xf32> to vector<8x128xbf16>
    %c0_14 = arith.constant 0 : index
    %c0_15 = arith.constant 0 : index
    %43 = vector.load %arg4[%c0_14, %c0_15] : memref<128x256xbf16, #tpu.memory_space<vmem>>, vector<128x256xbf16>
    %cst_16 = arith.constant dense<0.000000e+00> : vector<8x256xf32>
    %44 = tpu.matmul %42, %43, %cst_16 {dimension_numbers = #tpu.dot_dimension_numbers<[1], [0], [0], [1], [0, 0, 1, 1], [], []>} : vector<8x128xbf16>, vector<128x256xbf16>, vector<8x256xf32> -> vector<8x256xf32>
    %45 = vector.broadcast %2 : vector<1x256xf32> to vector<8x256xf32>
    %46 = arith.addf %44, %45 : vector<8x256xf32>
    %cst_17 = arith.constant 0.000000e+00 : f32
    %47 = vector.broadcast %cst_17 : f32 to vector<8x256xf32>
    %48 = arith.maximumf %46, %47 : vector<8x256xf32>
    %49 = arith.truncf %48 : vector<8x256xf32> to vector<8x256xbf16>
    %c0_18 = arith.constant 0 : index
    %c0_19 = arith.constant 0 : index
    %50 = vector.load %arg5[%c0_18, %c0_19] : memref<256x256xbf16, #tpu.memory_space<vmem>>, vector<256x256xbf16>
    %cst_20 = arith.constant dense<0.000000e+00> : vector<8x256xf32>
    %51 = tpu.matmul %49, %50, %cst_20 {dimension_numbers = #tpu.dot_dimension_numbers<[1], [0], [0], [1], [0, 0, 1, 1], [], []>} : vector<8x256xbf16>, vector<256x256xbf16>, vector<8x256xf32> -> vector<8x256xf32>
    %52 = vector.broadcast %3 : vector<1x256xf32> to vector<8x256xf32>
    %53 = arith.addf %51, %52 : vector<8x256xf32>
    %54 = vector.extract_strided_slice %53 {offsets = [0, 0], sizes = [8, 128], strides = [1, 1]} : vector<8x256xf32> to vector<8x128xf32>
    %55 = vector.extract_strided_slice %53 {offsets = [0, 128], sizes = [8, 128], strides = [1, 1]} : vector<8x256xf32> to vector<8x128xf32>
    %cst_21 = arith.constant dense<0xFF800000> : vector<8xf32>
    %56 = vector.multi_reduction <maximumf>, %54, %cst_21 [1] : vector<8x128xf32> to vector<8xf32>
    %57 = vector.shape_cast %56 : vector<8xf32> to vector<8x1xf32>
    %58 = vector.broadcast %57 : vector<8x1xf32> to vector<8x128xf32>
    %59 = arith.subf %54, %58 : vector<8x128xf32>
    %60 = math.exp %59 : vector<8x128xf32>
    %cst_22 = arith.constant dense<0.000000e+00> : vector<8xf32>
    %61 = vector.multi_reduction <add>, %60, %cst_22 [1] : vector<8x128xf32> to vector<8xf32>
    %62 = vector.shape_cast %61 : vector<8xf32> to vector<8x1xf32>
    %63 = tpu.reciprocal %62 {approx = true} : vector<8x1xf32> -> vector<8x1xf32>
    %64 = vector.broadcast %63 : vector<8x1xf32> to vector<8x128xf32>
    %65 = arith.mulf %60, %64 : vector<8x128xf32>
    %66 = tpu.concatenate %54, %65, %55 in 1 : vector<8x128xf32>, vector<8x128xf32>, vector<8x128xf32> -> vector<8x384xf32>
    %c0_23 = arith.constant 0 : index
    %c0_24 = arith.constant 0 : index
    %67 = vector.load %arg8[%c0_23, %c0_24] : memref<8x384xf32, #tpu.memory_space<vmem>>, vector<8x384xf32>
    tpu.vector_store %arg8[%c0_23, %c0_24], %66 {strides = array<i32>} : memref<8x384xf32, #tpu.memory_space<vmem>>, vector<8x384xf32>,
    return
  }
  func.func @transform_0(%arg0: i32) -> (i32, i32) {
    %c0_i32 = arith.constant 0 : i32
    %c0_i32_0 = arith.constant 0 : i32
    return %arg0, %c0_i32 : i32, i32
  }
  func.func @transform_1(%arg0: i32) -> (i32, i32) {
    %c0_i32 = arith.constant 0 : i32
    %c0_i32_0 = arith.constant 0 : i32
    %c0_i32_1 = arith.constant 0 : i32
    return %c0_i32, %c0_i32_0 : i32, i32
  }
  func.func @transform_2(%arg0: i32) -> (i32, i32) {
    %c0_i32 = arith.constant 0 : i32
    %c0_i32_0 = arith.constant 0 : i32
    %c0_i32_1 = arith.constant 0 : i32
    return %c0_i32, %c0_i32_0 : i32, i32
  }
  func.func @transform_3(%arg0: i32) -> (i32, i32) {
    %c0_i32 = arith.constant 0 : i32
    %c0_i32_0 = arith.constant 0 : i32
    %c0_i32_1 = arith.constant 0 : i32
    return %c0_i32, %c0_i32_0 : i32, i32
  }
  func.func @transform_4(%arg0: i32) -> (i32, i32) {
    %c0_i32 = arith.constant 0 : i32
    %c0_i32_0 = arith.constant 0 : i32
    %c0_i32_1 = arith.constant 0 : i32
    return %c0_i32, %c0_i32_0 : i32, i32
  }
  func.func @transform_5(%arg0: i32) -> (i32, i32) {
    %c0_i32 = arith.constant 0 : i32
    %c0_i32_0 = arith.constant 0 : i32
    %c0_i32_1 = arith.constant 0 : i32
    return %c0_i32, %c0_i32_0 : i32, i32
  }
  func.func @transform_6(%arg0: i32) -> (i32, i32) {
    %c0_i32 = arith.constant 0 : i32
    %c0_i32_0 = arith.constant 0 : i32
    return %arg0, %c0_i32 : i32, i32
  }
  func.func @transform_7(%arg0: i32) -> (i32, i32) {
    %c0_i32 = arith.constant 0 : i32
    %c0_i32_0 = arith.constant 0 : i32
    return %arg0, %c0_i32 : i32, i32
  }
}

</mosaic_0001>

<llo_original>
// kernel: tpu_custom_call.1
$region0: #{tpu_custom_call.1}
  #allocation0 [shape = 'u32[]', space=smem, size = 0x4, offset = 0x4, fixed_abs, tag = 'smem constant byte address 0x4 - core index']
  #allocation1 [shape = 'u32[72,128]{1,0:T(1,128)}', space=vmem, size = 0x9000, scoped, tag = 'internal scratch']
  %s0 = inlined_call_operand.vmem [shape: f32[8,4], index: 0, kind: input, shape index: {}]
  %s1 = inlined_call_operand.vmem [shape: bf16[4,128], index: 1, kind: input, shape index: {}]
  %s2 = inlined_call_operand.hbm [shape: bf16[128,128], index: 2, kind: input, shape index: {}]
  %s3 = inlined_call_operand.hbm [shape: bf16[128,256], index: 3, kind: input, shape index: {}]
  %s4 = inlined_call_operand.hbm [shape: bf16[256,256], index: 4, kind: input, shape index: {}]
  %s5 = inlined_call_operand.vmem [shape: f32[1,768], index: 5, kind: input, shape index: {}]
  %s6 = inlined_call_operand.hbm [shape: f32[8,128], index: 6, kind: output, shape index: {0}]
  %s7 = inlined_call_operand.hbm [shape: f32[8,384], index: 7, kind: output, shape index: {1}]
  %8 = xla_tuple %s6, %s7
  %s9 = sld [smem:[#allocation0]]
  $region54: #{tpu_custom_call.1} parent=0
    _
  %s11 = ssub.s32 1, %s9
  %s12 = scalar_select 0, %s11, %s9
  $region1: #{tpu_custom_call.1} parent=0
    #allocation2 [shape = 'u8[32768]{0}', space=vmem, size = 0x8000, scoped, tag = 'input window, operand 2, single buffered']
    #allocation3 [shape = 's32[1]{0}', space=sflag, size = 0x4, scoped, tag = 'scoped memory for tpu_custom_call.1']
    #allocation4 [shape = 's32[1]{0}', space=sflag, size = 0x4, scoped, tag = 'scoped memory for tpu_custom_call.1']
    #allocation5 [shape = 'u8[65536]{0}', space=vmem, size = 0x10000, scoped, tag = 'input window, operand 3, single buffered']
    #allocation6 [shape = 's32[1]{0}', space=sflag, size = 0x4, scoped, tag = 'scoped memory for tpu_custom_call.1']
    #allocation7 [shape = 'u8[131072]{0}', space=vmem, size = 0x20000, scoped, tag = 'input window, operand 4, single buffered']
    #allocation8 [shape = 'u8[4096]{0}', space=vmem, size = 0x1000, scoped, tag = 'output window, operand 0, single buffered']
    #allocation9 [shape = 'u8[12288]{0}', space=vmem, size = 0x3000, scoped, tag = 'output window, operand 1, single buffered']
    #allocation10 [shape = 's32[1]{0}', space=sflag, size = 0x4, scoped, tag = 'scoped memory for tpu_custom_call.1']
    %13 = vsyncpa [#allocation3], 0
    %14 = vsyncpa [#allocation6], 0
    %15 = vsyncpa [#allocation4], 0
    %16 = vsyncpa [#allocation10], 0
    // Predicated region
    $region2: #{tpu_custom_call.1} parent=1 // pred_check
      _
    $region3: #{tpu_custom_call.1} parent=1 // pred_check_branch
      %18 = sbr.rel (0) target = $region5
    $region4: #{tpu_custom_call.1} parent=1 // pred_region
      _
    $region5: #{tpu_custom_call.1} parent=1 // pred_fallthru
      _
    // Predicated region
    $region6: #{tpu_custom_call.1} parent=1 // pred_check
      _
    $region7: #{tpu_custom_call.1} parent=1 // pred_check_branch
      %20 = sbr.rel (0) target = $region9
    $region8: #{tpu_custom_call.1} parent=1 // pred_region
      _
    $region9: #{tpu_custom_call.1} parent=1 // pred_fallthru
      _
    // Predicated region
    $region10: #{tpu_custom_call.1} parent=1 // pred_check
      _
    $region11: #{tpu_custom_call.1} parent=1 // pred_check_branch
      %22 = sbr.rel (0) target = $region13
    $region12: #{tpu_custom_call.1} parent=1 // pred_region
      %24 = vsyncadd [#allocation3], 0
      %s25 = sshll.u32 %s2, 4
      %s26 = int_to_ptr.hbm [resolvable:$true] %s25
      %s27 = sshll.u32 [#allocation2], 4
      %s28 = int_to_ptr.vmem [resolvable:$true] %s27
      %33 = dma.hbm_to_vmem [thread:$0]  %s26, 1024, %s28, [#allocation3], 64, 64, 4
    $region13: #{tpu_custom_call.1} parent=1 // pred_fallthru
      _
    // Predicated region
    $region14: #{tpu_custom_call.1} parent=1 // pred_check
      _
    $region15: #{tpu_custom_call.1} parent=1 // pred_check_branch
      %35 = sbr.rel (0) target = $region17
    $region16: #{tpu_custom_call.1} parent=1 // pred_region
      %37 = vsyncadd [#allocation6], 0
      %s38 = sshll.u32 %s3, 4
      %s39 = int_to_ptr.hbm [resolvable:$true] %s38
      %s40 = sshll.u32 [#allocation5], 4
      %s41 = int_to_ptr.vmem [resolvable:$true] %s40
      %46 = dma.hbm_to_vmem [thread:$0]  %s39, 2048, %s41, [#allocation6], 128, 128, 8
    $region17: #{tpu_custom_call.1} parent=1 // pred_fallthru
      _
    // Predicated region
    $region18: #{tpu_custom_call.1} parent=1 // pred_check
      _
    $region19: #{tpu_custom_call.1} parent=1 // pred_check_branch
      %48 = sbr.rel (0) target = $region21
    $region20: #{tpu_custom_call.1} parent=1 // pred_region
      %50 = vsyncadd [#allocation6], 0
      %s51 = sshll.u32 %s4, 4
      %s52 = int_to_ptr.hbm [resolvable:$true] %s51
      %s53 = sshll.u32 [#allocation7], 4
      %s54 = int_to_ptr.vmem [resolvable:$true] %s53
      %59 = dma.hbm_to_vmem [thread:$0]  %s52, 4096, %s54, [#allocation6], 128, 128, 8
    $region21: #{tpu_custom_call.1} parent=1 // pred_fallthru
      _
    // Predicated region
    $region22: #{tpu_custom_call.1} parent=1 // pred_check
      _
    $region23: #{tpu_custom_call.1} parent=1 // pred_check_branch
      %61 = sbr.rel (0) target = $region25
    $region24: #{tpu_custom_call.1} parent=1 // pred_region
      _
    $region25: #{tpu_custom_call.1} parent=1 // pred_fallthru
      _
    // Predicated region
    $region26: #{tpu_custom_call.1} parent=1 // pred_check
      _
    $region27: #{tpu_custom_call.1} parent=1 // pred_check_branch
      %63 = sbr.rel (0) target = $region29
    $region28: #{tpu_custom_call.1} parent=1 // pred_region
      %65 = dma.done [#allocation3], 1024
    $region29: #{tpu_custom_call.1} parent=1 // pred_fallthru
      _
    // Predicated region
    $region30: #{tpu_custom_call.1} parent=1 // pred_check
      _
    $region31: #{tpu_custom_call.1} parent=1 // pred_check_branch
      %67 = sbr.rel (0) target = $region33
    $region32: #{tpu_custom_call.1} parent=1 // pred_region
      %69 = dma.done [#allocation6], 2048
    $region33: #{tpu_custom_call.1} parent=1 // pred_fallthru
      _
    // Predicated region
    $region34: #{tpu_custom_call.1} parent=1 // pred_check
      _
    $region35: #{tpu_custom_call.1} parent=1 // pred_check_branch
      %71 = sbr.rel (0) target = $region37
    $region36: #{tpu_custom_call.1} parent=1 // pred_region
      %73 = dma.done [#allocation6], 4096
    $region37: #{tpu_custom_call.1} parent=1 // pred_fallthru
      _
    %v74 = vld [vmem:[%s5] sm:$0x1]
    %v75 = vld [vmem:[%s5 + $0x1] sm:$0x1]
    %v76 = vld [vmem:[%s5 + $0x2] sm:$0x3]
    %v77 = vld [vmem:[%s5 + $0x4] sm:$0x3]
    %v78 = vld [vmem:[%s0] sm:$0xff]
    %v79 = vld [vmem:[%s1] sm:$0x3]
    %v80 = vunpack.c.l.bf16 %v79
    %82 = vset.pattern.permute.xlu0 0
    %83 = vperm.xlu0 %82, %v78
    %v84 = vpop.permute.xlu0 %83
    %v86 = vperm.slane %v80, 0
    %v87 = vmul.f32 %v84, %v86
    %88 = vset.pattern.permute.xlu0 1
    %89 = vperm.xlu0 %88, %v78
    %v90 = vpop.permute.xlu0 %89
    %v92 = vperm.slane %v80, 1
    %v93 = vmul.f32 %v90, %v92
    %v94 = vadd.f32 %v87, %v93
    %95 = vset.pattern.permute.xlu0 2
    %96 = vperm.xlu0 %95, %v78
    %v97 = vpop.permute.xlu0 %96
    %v99 = vperm.slane %v80, 2
    %v100 = vmul.f32 %v97, %v99
    %v101 = vadd.f32 %v94, %v100
    %102 = vset.pattern.permute.xlu0 3
    %103 = vperm.xlu0 %102, %v78
    %v104 = vpop.permute.xlu0 %103
    %v106 = vperm.slane %v80, 3
    %v107 = vmul.f32 %v104, %v106
    %v108 = vadd.f32 %v101, %v107
    %v110 = vperm.slane %v74, 0
    %v112 = vadd.f32 %v108, %v110
    %v113 = vmax.f32 %v112, 0.0
    %v114 = vpack.c.bf16 %v113, %v113
    %v115 = vld [vmem:[#allocation2] sm:$0xf]
    %v116 = vld [vmem:[#allocation2 + $0x4] sm:$0xf]
    %v117 = vld [vmem:[#allocation2 + $0x8] sm:$0xf]
    %v118 = vld [vmem:[#allocation2 + $0xc] sm:$0xf]
    %v119 = vld [vmem:[#allocation2 + $0x10] sm:$0xf]
    %v120 = vld [vmem:[#allocation2 + $0x14] sm:$0xf]
    %v121 = vld [vmem:[#allocation2 + $0x18] sm:$0xf]
    %v122 = vld [vmem:[#allocation2 + $0x1c] sm:$0xf]
    %v123 = vld [vmem:[#allocation2 + $0x20] sm:$0xf]
    %v124 = vld [vmem:[#allocation2 + $0x24] sm:$0xf]
    %v125 = vld [vmem:[#allocation2 + $0x28] sm:$0xf]
    %v126 = vld [vmem:[#allocation2 + $0x2c] sm:$0xf]
    %v127 = vld [vmem:[#allocation2 + $0x30] sm:$0xf]
    %v128 = vld [vmem:[#allocation2 + $0x34] sm:$0xf]
    %v129 = vld [vmem:[#allocation2 + $0x38] sm:$0xf]
    %v130 = vld [vmem:[#allocation2 + $0x3c] sm:$0xf]
    %v132 = vperm.slane %v75, 0
    %v150 = vunpack.c.l.b16 %v115
    %v151 = vunpack.c.l.b16 %v116
    %v152 = vunpack.c.l.b16 %v117
    %v153 = vunpack.c.l.b16 %v118
    %v154 = vunpack.c.l.b16 %v119
    %v155 = vunpack.c.l.b16 %v120
    %v156 = vunpack.c.l.b16 %v121
    %v157 = vunpack.c.l.b16 %v122
    %v158 = vunpack.c.l.b16 %v123
    %v159 = vunpack.c.l.b16 %v124
    %v160 = vunpack.c.l.b16 %v125
    %v161 = vunpack.c.l.b16 %v126
    %v162 = vunpack.c.l.b16 %v127
    %v163 = vunpack.c.l.b16 %v128
    %v164 = vunpack.c.l.b16 %v129
    %v165 = vunpack.c.l.b16 %v130
    %v166 = vpack.c.b16 %v151, %v150
    %v167 = vpack.c.b16 %v153, %v152
    %v168 = vpack.c.b16 %v155, %v154
    %v169 = vpack.c.b16 %v157, %v156
    %v170 = vpack.c.b16 %v159, %v158
    %v171 = vpack.c.b16 %v161, %v160
    %v172 = vpack.c.b16 %v163, %v162
    %v173 = vpack.c.b16 %v165, %v164
    %182 = vmatpush.bf16.msra.mxu0 %v173
    %183 = vmatpush.bf16.msra.mxu0 %v172
    %184 = vmatpush.bf16.msra.mxu0 %v171
    %185 = vmatpush.bf16.msra.mxu0 %v170
    %186 = vmatpush.bf16.msra.mxu0 %v169
    %187 = vmatpush.bf16.msra.mxu0 %v168
    %188 = vmatpush.bf16.msra.mxu0 %v167
    %189 = vmatpush.bf16.msra.mxu0 %v166
    %190 = vmatmul.bf16.gmra.mxu0 %v114
    %v191 = vpop.f32.mrf.mxu0
    %v192 = vadd.f32 %v132, %v191
    %v193 = vpop.f32.mrf.mxu0
    %194 = vdwg.mxu0
    %v195 = vmax.f32 %v192, 0.0
    %196 = vst [vmem:[#allocation8] sm:$0xff] %v195
    %v197 = vpack.c.bf16 %v195, %v195
    %v198 = vld [vmem:[#allocation5] sm:$0xff]
    %v199 = vld [vmem:[#allocation5 + $0x8] sm:$0xff]
    %v200 = vld [vmem:[#allocation5 + $0x10] sm:$0xff]
    %v201 = vld [vmem:[#allocation5 + $0x18] sm:$0xff]
    %v202 = vld [vmem:[#allocation5 + $0x20] sm:$0xff]
    %v203 = vld [vmem:[#allocation5 + $0x28] sm:$0xff]
    %v204 = vld [vmem:[#allocation5 + $0x30] sm:$0xff]
    %v205 = vld [vmem:[#allocation5 + $0x38] sm:$0xff]
    %v206 = vld [vmem:[#allocation5 + $0x40] sm:$0xff]
    %v207 = vld [vmem:[#allocation5 + $0x48] sm:$0xff]
    %v208 = vld [vmem:[#allocation5 + $0x50] sm:$0xff]
    %v209 = vld [vmem:[#allocation5 + $0x58] sm:$0xff]
    %v210 = vld [vmem:[#allocation5 + $0x60] sm:$0xff]
    %v211 = vld [vmem:[#allocation5 + $0x68] sm:$0xff]
    %v212 = vld [vmem:[#allocation5 + $0x70] sm:$0xff]
    %v213 = vld [vmem:[#allocation5 + $0x78] sm:$0xff]
    %v215 = vperm.slane %v76, 0
    %v216 = vperm.slane %v76, 1
    %v235 = vunpack.c.l.b16 %v198
    %v236 = vunpack.c.h.b16 %v198
    %v237 = vunpack.c.l.b16 %v199
    %v238 = vunpack.c.h.b16 %v199
    %v239 = vunpack.c.l.b16 %v200
    %v240 = vunpack.c.h.b16 %v200
    %v241 = vunpack.c.l.b16 %v201
    %v242 = vunpack.c.h.b16 %v201
    %v243 = vunpack.c.l.b16 %v202
    %v244 = vunpack.c.h.b16 %v202
    %v245 = vunpack.c.l.b16 %v203
    %v246 = vunpack.c.h.b16 %v203
    %v247 = vunpack.c.l.b16 %v204
    %v248 = vunpack.c.h.b16 %v204
    %v249 = vunpack.c.l.b16 %v205
    %v250 = vunpack.c.h.b16 %v205
    %v251 = vunpack.c.l.b16 %v206
    %v252 = vunpack.c.h.b16 %v206
    %v253 = vunpack.c.l.b16 %v207
    %v254 = vunpack.c.h.b16 %v207
    %v255 = vunpack.c.l.b16 %v208
    %v256 = vunpack.c.h.b16 %v208
    %v257 = vunpack.c.l.b16 %v209
    %v258 = vunpack.c.h.b16 %v209
    %v259 = vunpack.c.l.b16 %v210
    %v260 = vunpack.c.h.b16 %v210
    %v261 = vunpack.c.l.b16 %v211
    %v262 = vunpack.c.h.b16 %v211
    %v263 = vunpack.c.l.b16 %v212
    %v264 = vunpack.c.h.b16 %v212
    %v265 = vunpack.c.l.b16 %v213
    %v266 = vunpack.c.h.b16 %v213
    %v267 = vpack.c.b16 %v237, %v235
    %v268 = vpack.c.b16 %v238, %v236
    %v269 = vpack.c.b16 %v241, %v239
    %v270 = vpack.c.b16 %v242, %v240
    %v271 = vpack.c.b16 %v245, %v243
    %v272 = vpack.c.b16 %v246, %v244
    %v273 = vpack.c.b16 %v249, %v247
    %v274 = vpack.c.b16 %v250, %v248
    %v275 = vpack.c.b16 %v253, %v251
    %v276 = vpack.c.b16 %v254, %v252
    %v277 = vpack.c.b16 %v257, %v255
    %v278 = vpack.c.b16 %v258, %v256
    %v279 = vpack.c.b16 %v261, %v259
    %v280 = vpack.c.b16 %v262, %v260
    %v281 = vpack.c.b16 %v265, %v263
    %v282 = vpack.c.b16 %v266, %v264
    %299 = vmatpush.bf16.msra.mxu0 %v281
    %300 = vmatpush.bf16.msra.mxu0 %v279
    %301 = vmatpush.bf16.msra.mxu0 %v277
    %302 = vmatpush.bf16.msra.mxu0 %v275
    %303 = vmatpush.bf16.msra.mxu0 %v273
    %304 = vmatpush.bf16.msra.mxu0 %v271
    %305 = vmatpush.bf16.msra.mxu0 %v269
    %306 = vmatpush.bf16.msra.mxu0 %v267
    %307 = vmatmul.bf16.gmra.mxu0 %v197
    %v308 = vpop.f32.mrf.mxu0
    %v309 = vadd.f32 %v215, %v308
    %v310 = vpop.f32.mrf.mxu0
    %311 = vdwg.mxu0
    %312 = vmatpush.bf16.msra.mxu0 %v282
    %313 = vmatpush.bf16.msra.mxu0 %v280
    %314 = vmatpush.bf16.msra.mxu0 %v278
    %315 = vmatpush.bf16.msra.mxu0 %v276
    %316 = vmatpush.bf16.msra.mxu0 %v274
    %317 = vmatpush.bf16.msra.mxu0 %v272
    %318 = vmatpush.bf16.msra.mxu0 %v270
    %319 = vmatpush.bf16.msra.mxu0 %v268
    %320 = vmatmul.bf16.gmra.mxu0 %v197
    %v321 = vpop.f32.mrf.mxu0
    %v322 = vadd.f32 %v216, %v321
    %v323 = vpop.f32.mrf.mxu0
    %324 = vdwg.mxu0
    %v325 = vmax.f32 %v309, 0.0
    %v326 = vmax.f32 %v322, 0.0
    %v327 = vpack.c.bf16 %v325, %v325
    %v328 = vpack.c.bf16 %v326, %v326
    %v329 = vld [vmem:[#allocation7] sm:$0xff]
    %v330 = vld [vmem:[#allocation7 + $0x8] sm:$0xff]
    %v331 = vld [vmem:[#allocation7 + $0x10] sm:$0xff]
    %v332 = vld [vmem:[#allocation7 + $0x18] sm:$0xff]
    %v333 = vld [vmem:[#allocation7 + $0x20] sm:$0xff]
    %v334 = vld [vmem:[#allocation7 + $0x28] sm:$0xff]
    %v335 = vld [vmem:[#allocation7 + $0x30] sm:$0xff]
    %v336 = vld [vmem:[#allocation7 + $0x38] sm:$0xff]
    %v337 = vld [vmem:[#allocation7 + $0x40] sm:$0xff]
    %v338 = vld [vmem:[#allocation7 + $0x48] sm:$0xff]
    %v339 = vld [vmem:[#allocation7 + $0x50] sm:$0xff]
    %v340 = vld [vmem:[#allocation7 + $0x58] sm:$0xff]
    %v341 = vld [vmem:[#allocation7 + $0x60] sm:$0xff]
    %v342 = vld [vmem:[#allocation7 + $0x68] sm:$0xff]
    %v343 = vld [vmem:[#allocation7 + $0x70] sm:$0xff]
    %v344 = vld [vmem:[#allocation7 + $0x78] sm:$0xff]
    %v345 = vld [vmem:[#allocation7 + $0x80] sm:$0xff]
    %v346 = vld [vmem:[#allocation7 + $0x88] sm:$0xff]
    %v347 = vld [vmem:[#allocation7 + $0x90] sm:$0xff]
    %v348 = vld [vmem:[#allocation7 + $0x98] sm:$0xff]
    %v349 = vld [vmem:[#allocation7 + $0xa0] sm:$0xff]
    %v350 = vld [vmem:[#allocation7 + $0xa8] sm:$0xff]
    %v351 = vld [vmem:[#allocation7 + $0xb0] sm:$0xff]
    %v352 = vld [vmem:[#allocation7 + $0xb8] sm:$0xff]
    %v353 = vld [vmem:[#allocation7 + $0xc0] sm:$0xff]
    %v354 = vld [vmem:[#allocation7 + $0xc8] sm:$0xff]
    %v355 = vld [vmem:[#allocation7 + $0xd0] sm:$0xff]
    %v356 = vld [vmem:[#allocation7 + $0xd8] sm:$0xff]
    %v357 = vld [vmem:[#allocation7 + $0xe0] sm:$0xff]
    %v358 = vld [vmem:[#allocation7 + $0xe8] sm:$0xff]
    %v359 = vld [vmem:[#allocation7 + $0xf0] sm:$0xff]
    %v360 = vld [vmem:[#allocation7 + $0xf8] sm:$0xff]
    %v362 = vperm.slane %v77, 0
    %v363 = vperm.slane %v77, 1
    %v398 = vunpack.c.l.b16 %v329
    %v399 = vunpack.c.h.b16 %v329
    %v400 = vunpack.c.l.b16 %v330
    %v401 = vunpack.c.h.b16 %v330
    %v402 = vunpack.c.l.b16 %v331
    %v403 = vunpack.c.h.b16 %v331
    %v404 = vunpack.c.l.b16 %v332
    %v405 = vunpack.c.h.b16 %v332
    %v406 = vunpack.c.l.b16 %v333
    %v407 = vunpack.c.h.b16 %v333
    %v408 = vunpack.c.l.b16 %v334
    %v409 = vunpack.c.h.b16 %v334
    %v410 = vunpack.c.l.b16 %v335
    %v411 = vunpack.c.h.b16 %v335
    %v412 = vunpack.c.l.b16 %v336
    %v413 = vunpack.c.h.b16 %v336
    %v414 = vunpack.c.l.b16 %v337
    %v415 = vunpack.c.h.b16 %v337
    %v416 = vunpack.c.l.b16 %v338
    %v417 = vunpack.c.h.b16 %v338
    %v418 = vunpack.c.l.b16 %v339
    %v419 = vunpack.c.h.b16 %v339
    %v420 = vunpack.c.l.b16 %v340
    %v421 = vunpack.c.h.b16 %v340
    %v422 = vunpack.c.l.b16 %v341
    %v423 = vunpack.c.h.b16 %v341
    %v424 = vunpack.c.l.b16 %v342
    %v425 = vunpack.c.h.b16 %v342
    %v426 = vunpack.c.l.b16 %v343
    %v427 = vunpack.c.h.b16 %v343
    %v428 = vunpack.c.l.b16 %v344
    %v429 = vunpack.c.h.b16 %v344
    %v430 = vunpack.c.l.b16 %v345
    %v431 = vunpack.c.h.b16 %v345
    %v432 = vunpack.c.l.b16 %v346
    %v433 = vunpack.c.h.b16 %v346
    %v434 = vunpack.c.l.b16 %v347
    %v435 = vunpack.c.h.b16 %v347
    %v436 = vunpack.c.l.b16 %v348
    %v437 = vunpack.c.h.b16 %v348
    %v438 = vunpack.c.l.b16 %v349
    %v439 = vunpack.c.h.b16 %v349
    %v440 = vunpack.c.l.b16 %v350
    %v441 = vunpack.c.h.b16 %v350
    %v442 = vunpack.c.l.b16 %v351
    %v443 = vunpack.c.h.b16 %v351
    %v444 = vunpack.c.l.b16 %v352
    %v445 = vunpack.c.h.b16 %v352
    %v446 = vunpack.c.l.b16 %v353
    %v447 = vunpack.c.h.b16 %v353
    %v448 = vunpack.c.l.b16 %v354
    %v449 = vunpack.c.h.b16 %v354
    %v450 = vunpack.c.l.b16 %v355
    %v451 = vunpack.c.h.b16 %v355
    %v452 = vunpack.c.l.b16 %v356
    %v453 = vunpack.c.h.b16 %v356
    %v454 = vunpack.c.l.b16 %v357
    %v455 = vunpack.c.h.b16 %v357
    %v456 = vunpack.c.l.b16 %v358
    %v457 = vunpack.c.h.b16 %v358
    %v458 = vunpack.c.l.b16 %v359
    %v459 = vunpack.c.h.b16 %v359
    %v460 = vunpack.c.l.b16 %v360
    %v461 = vunpack.c.h.b16 %v360
    %v462 = vpack.c.b16 %v400, %v398
    %v463 = vpack.c.b16 %v401, %v399
    %v464 = vpack.c.b16 %v404, %v402
    %v465 = vpack.c.b16 %v405, %v403
    %v466 = vpack.c.b16 %v408, %v406
    %v467 = vpack.c.b16 %v409, %v407
    %v468 = vpack.c.b16 %v412, %v410
    %v469 = vpack.c.b16 %v413, %v411
    %v470 = vpack.c.b16 %v416, %v414
    %v471 = vpack.c.b16 %v417, %v415
    %v472 = vpack.c.b16 %v420, %v418
    %v473 = vpack.c.b16 %v421, %v419
    %v474 = vpack.c.b16 %v424, %v422
    %v475 = vpack.c.b16 %v425, %v423
    %v476 = vpack.c.b16 %v428, %v426
    %v477 = vpack.c.b16 %v429, %v427
    %v478 = vpack.c.b16 %v432, %v430
    %v479 = vpack.c.b16 %v433, %v431
    %v480 = vpack.c.b16 %v436, %v434
    %v481 = vpack.c.b16 %v437, %v435
    %v482 = vpack.c.b16 %v440, %v438
    %v483 = vpack.c.b16 %v441, %v439
    %v484 = vpack.c.b16 %v444, %v442
    %v485 = vpack.c.b16 %v445, %v443
    %v486 = vpack.c.b16 %v448, %v446
    %v487 = vpack.c.b16 %v449, %v447
    %v488 = vpack.c.b16 %v452, %v450
    %v489 = vpack.c.b16 %v453, %v451
    %v490 = vpack.c.b16 %v456, %v454
    %v491 = vpack.c.b16 %v457, %v455
    %v492 = vpack.c.b16 %v460, %v458
    %v493 = vpack.c.b16 %v461, %v459
    %526 = vmatpush.bf16.msra.mxu0 %v476
    %527 = vmatpush.bf16.msra.mxu0 %v474
    %528 = vmatpush.bf16.msra.mxu0 %v472
    %529 = vmatpush.bf16.msra.mxu0 %v470
    %530 = vmatpush.bf16.msra.mxu0 %v468
    %531 = vmatpush.bf16.msra.mxu0 %v466
    %532 = vmatpush.bf16.msra.mxu0 %v464
    %533 = vmatpush.bf16.msra.mxu0 %v462
    %534 = vmatmul.bf16.gmra.mxu0 %v327
    %v535 = vpop.f32.mrf.mxu0
    %v536 = vadd.f32 %v362, %v535
    %v537 = vpop.f32.mrf.mxu0
    %538 = vdwg.mxu0
    %539 = vmatpush.bf16.msra.mxu0 %v492
    %540 = vmatpush.bf16.msra.mxu0 %v490
    %541 = vmatpush.bf16.msra.mxu0 %v488
    %542 = vmatpush.bf16.msra.mxu0 %v486
    %543 = vmatpush.bf16.msra.mxu0 %v484
    %544 = vmatpush.bf16.msra.mxu0 %v482
    %545 = vmatpush.bf16.msra.mxu0 %v480
    %546 = vmatpush.bf16.msra.mxu0 %v478
    %547 = vmatmul.bf16.gmra.mxu0 %v328
    %v548 = vpop.f32.mrf.mxu0
    %v549 = vadd.f32 %v536, %v548
    %v550 = vpop.f32.mrf.mxu0
    %551 = vdwg.mxu0
    %552 = vmatpush.bf16.msra.mxu0 %v477
    %553 = vmatpush.bf16.msra.mxu0 %v475
    %554 = vmatpush.bf16.msra.mxu0 %v473
    %555 = vmatpush.bf16.msra.mxu0 %v471
    %556 = vmatpush.bf16.msra.mxu0 %v469
    %557 = vmatpush.bf16.msra.mxu0 %v467
    %558 = vmatpush.bf16.msra.mxu0 %v465
    %559 = vmatpush.bf16.msra.mxu0 %v463
    %560 = vmatmul.bf16.gmra.mxu0 %v327
    %v561 = vpop.f32.mrf.mxu0
    %v562 = vadd.f32 %v363, %v561
    %v563 = vpop.f32.mrf.mxu0
    %564 = vdwg.mxu0
    %565 = vmatpush.bf16.msra.mxu0 %v493
    %566 = vmatpush.bf16.msra.mxu0 %v491
    %567 = vmatpush.bf16.msra.mxu0 %v489
    %568 = vmatpush.bf16.msra.mxu0 %v487
    %569 = vmatpush.bf16.msra.mxu0 %v485
    %570 = vmatpush.bf16.msra.mxu0 %v483
    %571 = vmatpush.bf16.msra.mxu0 %v481
    %572 = vmatpush.bf16.msra.mxu0 %v479
    %573 = vmatmul.bf16.gmra.mxu0 %v328
    %v574 = vpop.f32.mrf.mxu0
    %v575 = vadd.f32 %v562, %v574
    %v576 = vpop.f32.mrf.mxu0
    %577 = vdwg.mxu0
    %578 = vmax.xlane.f32.xlu0 %v549
    %v579 = vpop.xlane.xlu0 %578
    %v580 = vsub.f32 %v549, %v579
    %v581 = vmul.f32 %v580, 1.442695
    %v582 = vpow.pop %v581
    %583 = vadd.xlane.f32.xlu0 %v582
    %v584 = vpop.xlane.xlu0 %583
    %v585 = vrcp.pop %v584
    %v586 = vmul.f32 %v582, %v585
    %587 = vst [vmem:[#allocation9] sm:$0xff] %v549
    %588 = vst [vmem:[#allocation9 + $0x8] sm:$0xff] %v586
    %589 = vst [vmem:[#allocation9 + $0x10] sm:$0xff] %v575
    // Predicated region
    $region38: #{tpu_custom_call.1} parent=1 // pred_check
      _
    $region39: #{tpu_custom_call.1} parent=1 // pred_check_branch
      %591 = sbr.rel (0) target = $region41
    $region40: #{tpu_custom_call.1} parent=1 // pred_region
      %593 = vsyncadd [#allocation4], 0
      %s595 = sshll.u32 [#allocation8], 4
      %s596 = int_to_ptr.vmem [resolvable:$true] %s595
      %s597 = sshll.u32 %s6, 4
      %s598 = int_to_ptr.hbm [resolvable:$true] %s597
      %600 = dma.vmem_to_hbm [thread:$0]  %s596, 128, %s598, [#allocation4]
    $region41: #{tpu_custom_call.1} parent=1 // pred_fallthru
      _
    // Predicated region
    $region42: #{tpu_custom_call.1} parent=1 // pred_check
      _
    $region43: #{tpu_custom_call.1} parent=1 // pred_check_branch
      %602 = sbr.rel (0) target = $region45
    $region44: #{tpu_custom_call.1} parent=1 // pred_region
      %604 = vsyncadd [#allocation10], 0
      %s606 = sshll.u32 [#allocation9], 4
      %s607 = int_to_ptr.vmem [resolvable:$true] %s606
      %s608 = sshll.u32 %s7, 4
      %s609 = int_to_ptr.hbm [resolvable:$true] %s608
      %611 = dma.vmem_to_hbm [thread:$0]  %s607, 384, %s609, [#allocation10]
    $region45: #{tpu_custom_call.1} parent=1 // pred_fallthru
      _
    // Predicated region
    $region46: #{tpu_custom_call.1} parent=1 // pred_check
      _
    $region47: #{tpu_custom_call.1} parent=1 // pred_check_branch
      %613 = sbr.rel (0) target = $region49
    $region48: #{tpu_custom_call.1} parent=1 // pred_region
      %615 = dma.done [#allocation4], 128
    $region49: #{tpu_custom_call.1} parent=1 // pred_fallthru
      _
    // Predicated region
    $region50: #{tpu_custom_call.1} parent=1 // pred_check
      _
    $region51: #{tpu_custom_call.1} parent=1 // pred_check_branch
      %617 = sbr.rel (0) target = $region53
    $region52: #{tpu_custom_call.1} parent=1 // pred_region
      %619 = dma.done [#allocation10], 384
    $region53: #{tpu_custom_call.1} parent=1 // pred_fallthru
      _
    %620 = vsyncpa [#allocation3], 1
    %621 = vsyncpa [#allocation6], 1
    %622 = vsyncpa [#allocation4], 1
    %623 = vsyncpa [#allocation10], 1

</llo_original>
